<compile_context>
chip_gen: v7x
topology: tpu7x:2x2x1
jax: 0.10.0
libtpu: 0.0.40
codegen_flags: <defaults>
</compile_context>

<pallas_src>
import jax
import jax.numpy as jnp
from jax.experimental import pallas as pl
from jax.experimental.pallas import tpu as pltpu

_LANE = 128      # vreg lane width
_SUBLANE = 8     # f32 sublane count


def _round_up(x: int, m: int) -> int:
    return ((x + m - 1) // m) * m


def _actor_kernel(obs_ref, w1_ref, b1_ref, w2_ref, b2_ref, w3_ref, b3_ref,
                  out_ref):
    # obs is already bf16 (streamed); MXU accumulates in f32.
    x = obs_ref[...]                                               # (TB, obs_dim)

    h1 = jnp.dot(x, w1_ref[...], preferred_element_type=jnp.float32)
    h1 = jnp.maximum(h1 + b1_ref[...], 0.0)                       # (TB, HP)

    h2 = jnp.dot(h1.astype(jnp.bfloat16), w2_ref[...],
                 preferred_element_type=jnp.float32)
    h2 = jnp.maximum(h2 + b2_ref[...], 0.0)                       # (TB, HP)

    a = jnp.dot(h2.astype(jnp.bfloat16), w3_ref[...],
                preferred_element_type=jnp.float32)
    a = jnp.tanh(a + b3_ref[...])                                 # (TB, act_dim)

    # OnnxableOffPolicy.forward: torch.clamp(action, -1, 1) (kept for parity).
    out_ref[...] = jnp.clip(a, -1.0, 1.0)


def prepare_actor_params(params):
    """One-time (init-time) padding + bf16 cast of the actor parameters.

    Hoisted out of the forward path so no per-call pad/cast HLOs touch HBM.
    Hidden dims are zero-padded to a multiple of 128 lanes (zero padding is
    exact through ReLU/tanh); obs_dim and act_dim stay unpadded since their
    blocks equal the full array dims.
    """
    w1, b1, w2, b2, w3, b3 = params
    obs_dim, hidden = w1.shape
    act_dim = w3.shape[1]
    hp = _round_up(hidden, _LANE)

    bf16, f32 = jnp.bfloat16, jnp.float32
    w1_p = jnp.zeros((obs_dim, hp), bf16).at[:, :hidden].set(w1.astype(bf16))
    w2_p = jnp.zeros((hp, hp), bf16).at[:hidden, :hidden].set(w2.astype(bf16))
    w3_p = jnp.zeros((hp, act_dim), bf16).at[:hidden, :].set(w3.astype(bf16))
    b1_p = jnp.zeros((1, hp), f32).at[:, :hidden].set(b1.reshape(1, -1).astype(f32))
    b2_p = jnp.zeros((1, hp), f32).at[:, :hidden].set(b2.reshape(1, -1).astype(f32))
    b3_p = b3.reshape(1, -1).astype(f32)
    return (w1_p, b1_p, w2_p, b2_p, w3_p, b3_p)


def _derive_vmem_limit(tile_b, obs_dim, hp, act_dim):
    weights = (obs_dim * hp + hp * hp + hp * act_dim) * 2   # bf16, single-buffered
    biases = (2 * hp + act_dim) * 4
    io = 2 * tile_b * (obs_dim * 2 + act_dim * 4)           # double-buffered obs/out tiles
    acts = 4 * tile_b * hp * 4                               # f32 intermediates (generous)
    needed = weights + biases + io + acts
    # Headroom, but stay well under v7x's 64 MiB physical VMEM.
    return int(min(48 * 1024 * 1024, max(16 * 1024 * 1024, 2 * needed)))


def onnxable_off_policy_forward(observation, prepared_params, *, tile_b=None):
    """Fused actor + clamp.

    observation: (B, obs_dim) float32 (cast to bf16 for streaming).
    prepared_params: output of prepare_actor_params (static, pre-padded).
    Returns (B, act_dim) float32.
    """
    w1_p, b1_p, w2_p, b2_p, w3_p, b3_p = prepared_params
    batch = observation.shape[0]
    obs_dim, hp = w1_p.shape
    act_dim = w3_p.shape[1]
    assert observation.shape[1] == obs_dim, "observation feature dim mismatch"

    if tile_b is None:
        tile_b = min(512, _round_up(batch, _SUBLANE))
    elif tile_b % _SUBLANE != 0:
        raise ValueError("tile_b must be a multiple of 8 (sublane alignment)")
    grid = (pl.cdiv(batch, tile_b),)   # partial final tile handled by Pallas

    # Stream observations as bf16 (halves input DMA; XLA fuses this cast into
    # the upstream producer when this runs inside a larger graph).
    obs_bf = observation.astype(jnp.bfloat16)

    cost = pl.CostEstimate(
        flops=2 * batch * (obs_dim * hp + hp * hp + hp * act_dim),
        transcendentals=batch * act_dim,
        bytes_accessed=(batch * obs_dim * 2
                        + (w1_p.size + w2_p.size + w3_p.size) * 2
                        + (b1_p.size + b2_p.size + b3_p.size) * 4
                        + batch * act_dim * 4),
    )

    resident = dict(pipeline_mode=pl.Buffered(1))   # constant index -> single buffer

    out = pl.pallas_call(
        _actor_kernel,
        out_shape=jax.ShapeDtypeStruct((batch, act_dim), jnp.float32),
        grid=grid,
        in_specs=[
            pl.BlockSpec((tile_b, obs_dim), lambda i: (i, 0)),          # obs: tiled
            pl.BlockSpec((obs_dim, hp), lambda i: (0, 0), **resident),  # w1
            pl.BlockSpec((1, hp), lambda i: (0, 0), **resident),        # b1
            pl.BlockSpec((hp, hp), lambda i: (0, 0), **resident),       # w2
            pl.BlockSpec((1, hp), lambda i: (0, 0), **resident),        # b2
            pl.BlockSpec((hp, act_dim), lambda i: (0, 0), **resident),  # w3
            pl.BlockSpec((1, act_dim), lambda i: (0, 0), **resident),   # b3
        ],
        out_specs=pl.BlockSpec((tile_b, act_dim), lambda i: (i, 0)),
        compiler_params=pltpu.CompilerParams(
            dimension_semantics=("parallel",),
            vmem_limit_bytes=_derive_vmem_limit(tile_b, obs_dim, hp, act_dim),
        ),
        cost_estimate=cost,
    )(obs_bf, w1_p, b1_p, w2_p, b2_p, w3_p, b3_p)

    return out


def init_actor_params(key, obs_dim, hidden, act_dim):
    """Deterministic synthetic actor parameters (no checkpoint loading)."""
    k1, k2, k3, k4, k5, k6 = jax.random.split(key, 6)
    scale = 0.1
    w1 = scale * jax.random.normal(k1, (obs_dim, hidden), jnp.float32)
    b1 = 0.01 * jax.random.normal(k4, (hidden,), jnp.float32)
    w2 = scale * jax.random.normal(k2, (hidden, hidden), jnp.float32)
    b2 = 0.01 * jax.random.normal(k5, (hidden,), jnp.float32)
    w3 = scale * jax.random.normal(k3, (hidden, act_dim), jnp.float32)
    b3 = 0.01 * jax.random.normal(k6, (act_dim,), jnp.float32)
    return (w1, b1, w2, b2, w3, b3)


def _reference_forward(observation, params):
    """Pure-JAX reference mirroring the kernel's bf16-weight / f32-accum math."""
    w1, b1, w2, b2, w3, b3 = params
    bf16 = jnp.bfloat16

    def mm(x, w):
        return jnp.dot(x.astype(bf16), w.astype(bf16),
                       preferred_element_type=jnp.float32)

    x = observation.astype(bf16)
    h1 = jnp.maximum(mm(x, w1) + b1.reshape(1, -1), 0.0)
    h2 = jnp.maximum(mm(h1, w2) + b2.reshape(1, -1), 0.0)
    a = jnp.tanh(mm(h2, w3) + b3.reshape(1, -1))
    return jnp.clip(a, -1.0, 1.0)


if __name__ == "__main__":
    batch, obs_dim, hidden, act_dim = 8, 16, 32, 8

    key = jax.random.PRNGKey(0)
    k_obs, k_params = jax.random.split(key)

    observation = jax.random.normal(k_obs, (batch, obs_dim), jnp.float32)
    params = init_actor_params(k_params, obs_dim, hidden, act_dim)

    # Hoisted, one-time parameter preparation (pad + bf16 cast).
    prepared = prepare_actor_params(params)

    action = onnxable_off_policy_forward(observation, prepared)
    action = jax.block_until_ready(action)

    ref = _reference_forward(observation, params)

    assert action.shape == (batch, act_dim)
    assert bool(jnp.all(action <= 1.0)) and bool(jnp.all(action >= -1.0))
    assert jnp.allclose(action, ref, atol=1e-2, rtol=1e-2), (
        float(jnp.max(jnp.abs(action - ref))))

    print("KERNEL_OK")
</pallas_src>

<mosaic_0001>
module attributes {stable_mosaic.version = 11 : i64} {
  func.func @_actor_kernel(%arg0: i32, %arg1: memref<8x16xbf16, #tpu.memory_space<vmem>>, %arg2: memref<16x128xbf16, #tpu.memory_space<vmem>>, %arg3: memref<1x128xf32, #tpu.memory_space<vmem>>, %arg4: memref<128x128xbf16, #tpu.memory_space<vmem>>, %arg5: memref<1x128xf32, #tpu.memory_space<vmem>>, %arg6: memref<128x8xbf16, #tpu.memory_space<vmem>>, %arg7: memref<1x8xf32, #tpu.memory_space<vmem>>, %arg8: memref<8x8xf32, #tpu.memory_space<vmem>>) attributes {dimension_semantics = [#tpu.dimension_semantics<parallel>], iteration_bounds = array<i64: 1>, scalar_prefetch = 0 : i64, scratch_operands = 0 : i64, tpu.core_type = #tpu.core_type<tc>, window_params = [{transform_indices = @transform_0, window_bounds = array<i64: 8, 16>}, {pipeline_mode = #tpu.pipeline_mode<synchronous>, transform_indices = @transform_1, window_bounds = array<i64: 16, 128>}, {pipeline_mode = #tpu.pipeline_mode<synchronous>, transform_indices = @transform_2, window_bounds = array<i64: 1, 128>}, {pipeline_mode = #tpu.pipeline_mode<synchronous>, transform_indices = @transform_3, window_bounds = array<i64: 128, 128>}, {pipeline_mode = #tpu.pipeline_mode<synchronous>, transform_indices = @transform_4, window_bounds = array<i64: 1, 128>}, {pipeline_mode = #tpu.pipeline_mode<synchronous>, transform_indices = @transform_5, window_bounds = array<i64: 128, 8>}, {pipeline_mode = #tpu.pipeline_mode<synchronous>, transform_indices = @transform_6, window_bounds = array<i64: 1, 8>}, {transform_indices = @transform_7, window_bounds = array<i64: 8, 8>}]} {
    %c0 = arith.constant 0 : index
    %c0_0 = arith.constant 0 : index
    %0 = vector.load %arg1[%c0, %c0_0] : memref<8x16xbf16, #tpu.memory_space<vmem>>, vector<8x16xbf16>
    %c0_1 = arith.constant 0 : index
    %c0_2 = arith.constant 0 : index
    %1 = vector.load %arg2[%c0_1, %c0_2] : memref<16x128xbf16, #tpu.memory_space<vmem>>, vector<16x128xbf16>
    %cst = arith.constant dense<0.000000e+00> : vector<8x128xf32>
    %2 = tpu.matmul %0, %1, %cst {dimension_numbers = #tpu.dot_dimension_numbers<[1], [0], [0], [1], [0, 0, 1, 1], [], []>} : vector<8x16xbf16>, vector<16x128xbf16>, vector<8x128xf32> -> vector<8x128xf32>
    %c0_3 = arith.constant 0 : index
    %c0_4 = arith.constant 0 : index
    %3 = vector.load %arg3[%c0_3, %c0_4] : memref<1x128xf32, #tpu.memory_space<vmem>>, vector<1x128xf32>
    %4 = vector.broadcast %3 : vector<1x128xf32> to vector<8x128xf32>
    %5 = arith.addf %2, %4 : vector<8x128xf32>
    %cst_5 = arith.constant 0.000000e+00 : f32
    %6 = vector.broadcast %cst_5 : f32 to vector<8x128xf32>
    %7 = arith.maximumf %5, %6 : vector<8x128xf32>
    %8 = arith.truncf %7 : vector<8x128xf32> to vector<8x128xbf16>
    %c0_6 = arith.constant 0 : index
    %c0_7 = arith.constant 0 : index
    %9 = vector.load %arg4[%c0_6, %c0_7] : memref<128x128xbf16, #tpu.memory_space<vmem>>, vector<128x128xbf16>
    %cst_8 = arith.constant dense<0.000000e+00> : vector<8x128xf32>
    %10 = tpu.matmul %8, %9, %cst_8 {dimension_numbers = #tpu.dot_dimension_numbers<[1], [0], [0], [1], [0, 0, 1, 1], [], []>} : vector<8x128xbf16>, vector<128x128xbf16>, vector<8x128xf32> -> vector<8x128xf32>
    %c0_9 = arith.constant 0 : index
    %c0_10 = arith.constant 0 : index
    %11 = vector.load %arg5[%c0_9, %c0_10] : memref<1x128xf32, #tpu.memory_space<vmem>>, vector<1x128xf32>
    %12 = vector.broadcast %11 : vector<1x128xf32> to vector<8x128xf32>
    %13 = arith.addf %10, %12 : vector<8x128xf32>
    %cst_11 = arith.constant 0.000000e+00 : f32
    %14 = vector.broadcast %cst_11 : f32 to vector<8x128xf32>
    %15 = arith.maximumf %13, %14 : vector<8x128xf32>
    %16 = arith.truncf %15 : vector<8x128xf32> to vector<8x128xbf16>
    %c0_12 = arith.constant 0 : index
    %c0_13 = arith.constant 0 : index
    %17 = vector.load %arg6[%c0_12, %c0_13] : memref<128x8xbf16, #tpu.memory_space<vmem>>, vector<128x8xbf16>
    %cst_14 = arith.constant dense<0.000000e+00> : vector<8x8xf32>
    %18 = tpu.matmul %16, %17, %cst_14 {dimension_numbers = #tpu.dot_dimension_numbers<[1], [0], [0], [1], [0, 0, 1, 1], [], []>} : vector<8x128xbf16>, vector<128x8xbf16>, vector<8x8xf32> -> vector<8x8xf32>
    %c0_15 = arith.constant 0 : index
    %c0_16 = arith.constant 0 : index
    %19 = vector.load %arg7[%c0_15, %c0_16] : memref<1x8xf32, #tpu.memory_space<vmem>>, vector<1x8xf32>
    %20 = vector.broadcast %19 : vector<1x8xf32> to vector<8x8xf32>
    %21 = arith.addf %18, %20 : vector<8x8xf32>
    %22 = math.tanh %21 : vector<8x8xf32>
    %cst_17 = arith.constant -1.000000e+00 : f32
    %cst_18 = arith.constant 1.000000e+00 : f32
    %23 = vector.broadcast %cst_17 : f32 to vector<8x8xf32>
    %24 = arith.maximumf %23, %22 : vector<8x8xf32>
    %25 = vector.broadcast %cst_18 : f32 to vector<8x8xf32>
    %26 = arith.minimumf %25, %24 : vector<8x8xf32>
    %c0_19 = arith.constant 0 : index
    %c0_20 = arith.constant 0 : index
    %27 = vector.load %arg8[%c0_19, %c0_20] : memref<8x8xf32, #tpu.memory_space<vmem>>, vector<8x8xf32>
    tpu.vector_store %arg8[%c0_19, %c0_20], %26 {strides = array<i32>} : memref<8x8xf32, #tpu.memory_space<vmem>>, vector<8x8xf32>,
    return
  }
  func.func @transform_0(%arg0: i32) -> (i32, i32) {
    %c0_i32 = arith.constant 0 : i32
    %c0_i32_0 = arith.constant 0 : i32
    return %arg0, %c0_i32 : i32, i32
  }
  func.func @transform_1(%arg0: i32) -> (i32, i32) {
    %c0_i32 = arith.constant 0 : i32
    %c0_i32_0 = arith.constant 0 : i32
    %c0_i32_1 = arith.constant 0 : i32
    return %c0_i32, %c0_i32_0 : i32, i32
  }
  func.func @transform_2(%arg0: i32) -> (i32, i32) {
    %c0_i32 = arith.constant 0 : i32
    %c0_i32_0 = arith.constant 0 : i32
    %c0_i32_1 = arith.constant 0 : i32
    return %c0_i32, %c0_i32_0 : i32, i32
  }
  func.func @transform_3(%arg0: i32) -> (i32, i32) {
    %c0_i32 = arith.constant 0 : i32
    %c0_i32_0 = arith.constant 0 : i32
    %c0_i32_1 = arith.constant 0 : i32
    return %c0_i32, %c0_i32_0 : i32, i32
  }
  func.func @transform_4(%arg0: i32) -> (i32, i32) {
    %c0_i32 = arith.constant 0 : i32
    %c0_i32_0 = arith.constant 0 : i32
    %c0_i32_1 = arith.constant 0 : i32
    return %c0_i32, %c0_i32_0 : i32, i32
  }
  func.func @transform_5(%arg0: i32) -> (i32, i32) {
    %c0_i32 = arith.constant 0 : i32
    %c0_i32_0 = arith.constant 0 : i32
    %c0_i32_1 = arith.constant 0 : i32
    return %c0_i32, %c0_i32_0 : i32, i32
  }
  func.func @transform_6(%arg0: i32) -> (i32, i32) {
    %c0_i32 = arith.constant 0 : i32
    %c0_i32_0 = arith.constant 0 : i32
    %c0_i32_1 = arith.constant 0 : i32
    return %c0_i32, %c0_i32_0 : i32, i32
  }
  func.func @transform_7(%arg0: i32) -> (i32, i32) {
    %c0_i32 = arith.constant 0 : i32
    %c0_i32_0 = arith.constant 0 : i32
    return %arg0, %c0_i32 : i32, i32
  }
}

</mosaic_0001>

<llo_original>
// kernel: tpu_custom_call.1
$region0: #{tpu_custom_call.1}
  #allocation0 [shape = 'u32[]', space=smem, size = 0x4, offset = 0x4, fixed_abs, tag = 'smem constant byte address 0x4 - core index']
  #allocation1 [shape = 'u32[144,128]{1,0:T(1,128)}', space=vmem, size = 0x12000, scoped, tag = 'internal scratch']
  %s0 = inlined_call_operand.vmem [shape: bf16[8,16], index: 0, kind: input, shape index: {}]
  %s1 = inlined_call_operand.vmem [shape: bf16[16,128], index: 1, kind: input, shape index: {}]
  %s2 = inlined_call_operand.vmem [shape: f32[1,128], index: 2, kind: input, shape index: {}]
  %s3 = inlined_call_operand.vmem [shape: bf16[128,128], index: 3, kind: input, shape index: {}]
  %s4 = inlined_call_operand.vmem [shape: f32[1,128], index: 4, kind: input, shape index: {}]
  %s5 = inlined_call_operand.vmem [shape: bf16[128,8], index: 5, kind: input, shape index: {}]
  %s6 = inlined_call_operand.vmem [shape: f32[1,8], index: 6, kind: input, shape index: {}]
  %s7 = inlined_call_operand.hbm [shape: f32[8,8], index: 7, kind: output, shape index: {}]
  %s8 = sld [smem:[#allocation0]]
  $region38: #{tpu_custom_call.1} parent=0
    _
  %s10 = ssub.s32 1, %s8
  %s11 = scalar_select 0, %s10, %s8
  $region1: #{tpu_custom_call.1} parent=0
    #allocation2 [shape = 'u8[4096]{0}', space=vmem, size = 0x1000, scoped, tag = 'output window, operand 0, single buffered']
    #allocation3 [shape = 's32[1]{0}', space=sflag, size = 0x4, scoped, tag = 'scoped memory for tpu_custom_call.1']
    %12 = vsyncpa [#allocation3], 0
    // Predicated region
    $region2: #{tpu_custom_call.1} parent=1 // pred_check
      _
    $region3: #{tpu_custom_call.1} parent=1 // pred_check_branch
      %14 = sbr.rel (0) target = $region5
    $region4: #{tpu_custom_call.1} parent=1 // pred_region
      _
    $region5: #{tpu_custom_call.1} parent=1 // pred_fallthru
      _
    // Predicated region
    $region6: #{tpu_custom_call.1} parent=1 // pred_check
      _
    $region7: #{tpu_custom_call.1} parent=1 // pred_check_branch
      %16 = sbr.rel (0) target = $region9
    $region8: #{tpu_custom_call.1} parent=1 // pred_region
      _
    $region9: #{tpu_custom_call.1} parent=1 // pred_fallthru
      _
    // Predicated region
    $region10: #{tpu_custom_call.1} parent=1 // pred_check
      _
    $region11: #{tpu_custom_call.1} parent=1 // pred_check_branch
      %18 = sbr.rel (0) target = $region13
    $region12: #{tpu_custom_call.1} parent=1 // pred_region
      _
    $region13: #{tpu_custom_call.1} parent=1 // pred_fallthru
      _
    // Predicated region
    $region14: #{tpu_custom_call.1} parent=1 // pred_check
      _
    $region15: #{tpu_custom_call.1} parent=1 // pred_check_branch
      %20 = sbr.rel (0) target = $region17
    $region16: #{tpu_custom_call.1} parent=1 // pred_region
      _
    $region17: #{tpu_custom_call.1} parent=1 // pred_fallthru
      _
    // Predicated region
    $region18: #{tpu_custom_call.1} parent=1 // pred_check
      _
    $region19: #{tpu_custom_call.1} parent=1 // pred_check_branch
      %22 = sbr.rel (0) target = $region21
    $region20: #{tpu_custom_call.1} parent=1 // pred_region
      _
    $region21: #{tpu_custom_call.1} parent=1 // pred_fallthru
      _
    // Predicated region
    $region22: #{tpu_custom_call.1} parent=1 // pred_check
      _
    $region23: #{tpu_custom_call.1} parent=1 // pred_check_branch
      %24 = sbr.rel (0) target = $region25
    $region24: #{tpu_custom_call.1} parent=1 // pred_region
      _
    $region25: #{tpu_custom_call.1} parent=1 // pred_fallthru
      _
    // Predicated region
    $region26: #{tpu_custom_call.1} parent=1 // pred_check
      _
    $region27: #{tpu_custom_call.1} parent=1 // pred_check_branch
      %26 = sbr.rel (0) target = $region29
    $region28: #{tpu_custom_call.1} parent=1 // pred_region
      _
    $region29: #{tpu_custom_call.1} parent=1 // pred_fallthru
      _
    %v28 = vld [vmem:[%s0] sm:$0xf]
    %v29 = vld [vmem:[%s1] sm:$0xf]
    %v30 = vld [vmem:[%s1 + $0x4] sm:$0xf]
    %v31 = vld [vmem:[%s2] sm:$0x1]
    %v33 = vlaneseq
    %v34 = vshrl.u32 %v33, 7
    %v35 = vsub.s32 0, %v34
    %v36 = vrot.slane %v31, %v35
    %v40 = vunpack.c.l.b16 %v29
    %v41 = vunpack.c.l.b16 %v30
    %v42 = vpack.c.b16 %v41, %v40
    %vm44 = vcmask 130048
    %v46 = vsel %vm44, %v28, 0
    %48 = vmatprep.subr.bf16.mxu0 0
    %49 = vmatpush1.bf16.msra.mxu0 %v42
    %50 = vmatprep.subr.bf16.mxu0 0
    %51 = vmatpush1.bf16.msra.mxu0 0
    %52 = vmatprep.subr.bf16.mxu0 0
    %53 = vmatpush1.bf16.msra.mxu0 0
    %54 = vmatprep.subr.bf16.mxu0 0
    %55 = vmatpush1.bf16.msra.mxu0 0
    %56 = vmatprep.subr.bf16.mxu0 0
    %57 = vmatpush1.bf16.msra.mxu0 0
    %58 = vmatprep.subr.bf16.mxu0 0
    %59 = vmatpush1.bf16.msra.mxu0 0
    %60 = vmatprep.subr.bf16.mxu0 0
    %61 = vmatpush1.bf16.msra.mxu0 0
    %62 = vmatprep.subr.bf16.mxu0 0
    %63 = vmatpush1.bf16.msra.mxu0 0
    %64 = vmatprep.subr.bf16.mxu0 0
    %65 = vmatpush1.bf16.msra.mxu0 0
    %66 = vmatprep.subr.bf16.mxu0 0
    %67 = vmatpush1.bf16.msra.mxu0 0
    %68 = vmatprep.subr.bf16.mxu0 0
    %69 = vmatpush1.bf16.msra.mxu0 0
    %70 = vmatprep.subr.bf16.mxu0 0
    %71 = vmatpush1.bf16.msra.mxu0 0
    %72 = vmatprep.subr.bf16.mxu0 0
    %73 = vmatpush1.bf16.msra.mxu0 0
    %74 = vmatprep.subr.bf16.mxu0 0
    %75 = vmatpush1.bf16.msra.mxu0 0
    %76 = vmatprep.subr.bf16.mxu0 0
    %77 = vmatpush1.bf16.msra.mxu0 0
    %78 = vmatprep.subr.bf16.mxu0 0
    %79 = vmatpush1.bf16.msra.mxu0 0
    %80 = vmatprep.mubr.bf16.mxu0 0
    %81 = vmatmul.mubr.bf16.gmra.mrb[0].mxu0 %v46
    %v82 = vpop.f32.mrb[0].mxu0
    %v83 = vadd.f32 %v36, %v82
    %v84 = vpop.f32.mrb[0].mxu0
    %v85 = vpop.f32.mrb[0].mxu0
    %v86 = vpop.f32.mrb[0].mxu0
    %87 = vdwg.mxu0
    %v88 = vmax.f32 %v83, 0.0
    %v89 = vpack.c.bf16 %v88, %v88
    %v90 = vld [vmem:[%s3] sm:$0xf]
    %v91 = vld [vmem:[%s3 + $0x4] sm:$0xf]
    %v92 = vld [vmem:[%s3 + $0x8] sm:$0xf]
    %v93 = vld [vmem:[%s3 + $0xc] sm:$0xf]
    %v94 = vld [vmem:[%s3 + $0x10] sm:$0xf]
    %v95 = vld [vmem:[%s3 + $0x14] sm:$0xf]
    %v96 = vld [vmem:[%s3 + $0x18] sm:$0xf]
    %v97 = vld [vmem:[%s3 + $0x1c] sm:$0xf]
    %v98 = vld [vmem:[%s3 + $0x20] sm:$0xf]
    %v99 = vld [vmem:[%s3 + $0x24] sm:$0xf]
    %v100 = vld [vmem:[%s3 + $0x28] sm:$0xf]
    %v101 = vld [vmem:[%s3 + $0x2c] sm:$0xf]
    %v102 = vld [vmem:[%s3 + $0x30] sm:$0xf]
    %v103 = vld [vmem:[%s3 + $0x34] sm:$0xf]
    %v104 = vld [vmem:[%s3 + $0x38] sm:$0xf]
    %v105 = vld [vmem:[%s3 + $0x3c] sm:$0xf]
    %v106 = vld [vmem:[%s4] sm:$0x1]
    %v108 = vlaneseq
    %v109 = vshrl.u32 %v108, 7
    %v110 = vsub.s32 0, %v109
    %v111 = vrot.slane %v106, %v110
    %v129 = vunpack.c.l.b16 %v90
    %v130 = vunpack.c.l.b16 %v91
    %v131 = vunpack.c.l.b16 %v92
    %v132 = vunpack.c.l.b16 %v93
    %v133 = vunpack.c.l.b16 %v94
    %v134 = vunpack.c.l.b16 %v95
    %v135 = vunpack.c.l.b16 %v96
    %v136 = vunpack.c.l.b16 %v97
    %v137 = vunpack.c.l.b16 %v98
    %v138 = vunpack.c.l.b16 %v99
    %v139 = vunpack.c.l.b16 %v100
    %v140 = vunpack.c.l.b16 %v101
    %v141 = vunpack.c.l.b16 %v102
    %v142 = vunpack.c.l.b16 %v103
    %v143 = vunpack.c.l.b16 %v104
    %v144 = vunpack.c.l.b16 %v105
    %v145 = vpack.c.b16 %v130, %v129
    %v146 = vpack.c.b16 %v132, %v131
    %v147 = vpack.c.b16 %v134, %v133
    %v148 = vpack.c.b16 %v136, %v135
    %v149 = vpack.c.b16 %v138, %v137
    %v150 = vpack.c.b16 %v140, %v139
    %v151 = vpack.c.b16 %v142, %v141
    %v152 = vpack.c.b16 %v144, %v143
    %161 = vmatprep.subr.bf16.mxu0 0
    %162 = vmatpush1.bf16.msra.mxu0 %v145
    %163 = vmatprep.subr.bf16.mxu0 0
    %164 = vmatpush1.bf16.msra.mxu0 %v146
    %165 = vmatprep.subr.bf16.mxu0 0
    %166 = vmatpush1.bf16.msra.mxu0 %v147
    %167 = vmatprep.subr.bf16.mxu0 0
    %168 = vmatpush1.bf16.msra.mxu0 %v148
    %169 = vmatprep.subr.bf16.mxu0 0
    %170 = vmatpush1.bf16.msra.mxu0 %v149
    %171 = vmatprep.subr.bf16.mxu0 0
    %172 = vmatpush1.bf16.msra.mxu0 %v150
    %173 = vmatprep.subr.bf16.mxu0 0
    %174 = vmatpush1.bf16.msra.mxu0 %v151
    %175 = vmatprep.subr.bf16.mxu0 0
    %176 = vmatpush1.bf16.msra.mxu0 %v152
    %177 = vmatprep.subr.bf16.mxu0 0
    %178 = vmatpush1.bf16.msra.mxu0 0
    %179 = vmatprep.subr.bf16.mxu0 0
    %180 = vmatpush1.bf16.msra.mxu0 0
    %181 = vmatprep.subr.bf16.mxu0 0
    %182 = vmatpush1.bf16.msra.mxu0 0
    %183 = vmatprep.subr.bf16.mxu0 0
    %184 = vmatpush1.bf16.msra.mxu0 0
    %185 = vmatprep.subr.bf16.mxu0 0
    %186 = vmatpush1.bf16.msra.mxu0 0
    %187 = vmatprep.subr.bf16.mxu0 0
    %188 = vmatpush1.bf16.msra.mxu0 0
    %189 = vmatprep.subr.bf16.mxu0 0
    %190 = vmatpush1.bf16.msra.mxu0 0
    %191 = vmatprep.subr.bf16.mxu0 0
    %192 = vmatpush1.bf16.msra.mxu0 0
    %193 = vmatprep.mubr.bf16.mxu0 0
    %194 = vmatmul.mubr.bf16.gmra.mrb[0].mxu0 %v89
    %v195 = vpop.f32.mrb[0].mxu0
    %v196 = vadd.f32 %v111, %v195
    %v197 = vpop.f32.mrb[0].mxu0
    %v198 = vpop.f32.mrb[0].mxu0
    %v199 = vpop.f32.mrb[0].mxu0
    %200 = vdwg.mxu0
    %v201 = vmax.f32 %v196, 0.0
    %v202 = vpack.c.bf16 %v201, %v201
    %v203 = vld [vmem:[%s5] sm:$0xf]
    %v204 = vld [vmem:[%s5 + $0x4] sm:$0xf]
    %v205 = vld [vmem:[%s5 + $0x8] sm:$0xf]
    %v206 = vld [vmem:[%s5 + $0xc] sm:$0xf]
    %v207 = vld [vmem:[%s5 + $0x10] sm:$0xf]
    %v208 = vld [vmem:[%s5 + $0x14] sm:$0xf]
    %v209 = vld [vmem:[%s5 + $0x18] sm:$0xf]
    %v210 = vld [vmem:[%s5 + $0x1c] sm:$0xf]
    %v211 = vld [vmem:[%s5 + $0x20] sm:$0xf]
    %v212 = vld [vmem:[%s5 + $0x24] sm:$0xf]
    %v213 = vld [vmem:[%s5 + $0x28] sm:$0xf]
    %v214 = vld [vmem:[%s5 + $0x2c] sm:$0xf]
    %v215 = vld [vmem:[%s5 + $0x30] sm:$0xf]
    %v216 = vld [vmem:[%s5 + $0x34] sm:$0xf]
    %v217 = vld [vmem:[%s5 + $0x38] sm:$0xf]
    %v218 = vld [vmem:[%s5 + $0x3c] sm:$0xf]
    %v219 = vld [vmem:[%s6] sm:$0x1]
    %v221 = vlaneseq
    %v222 = vshrl.u32 %v221, 7
    %v223 = vsub.s32 0, %v222
    %v224 = vrot.slane %v219, %v223
    %v242 = vunpack.c.l.b16 %v203
    %v243 = vunpack.c.l.b16 %v204
    %v244 = vunpack.c.l.b16 %v205
    %v245 = vunpack.c.l.b16 %v206
    %v246 = vunpack.c.l.b16 %v207
    %v247 = vunpack.c.l.b16 %v208
    %v248 = vunpack.c.l.b16 %v209
    %v249 = vunpack.c.l.b16 %v210
    %v250 = vunpack.c.l.b16 %v211
    %v251 = vunpack.c.l.b16 %v212
    %v252 = vunpack.c.l.b16 %v213
    %v253 = vunpack.c.l.b16 %v214
    %v254 = vunpack.c.l.b16 %v215
    %v255 = vunpack.c.l.b16 %v216
    %v256 = vunpack.c.l.b16 %v217
    %v257 = vunpack.c.l.b16 %v218
    %v258 = vpack.c.b16 %v243, %v242
    %v259 = vpack.c.b16 %v245, %v244
    %v260 = vpack.c.b16 %v247, %v246
    %v261 = vpack.c.b16 %v249, %v248
    %v262 = vpack.c.b16 %v251, %v250
    %v263 = vpack.c.b16 %v253, %v252
    %v264 = vpack.c.b16 %v255, %v254
    %v265 = vpack.c.b16 %v257, %v256
    %274 = vmatprep.subr.bf16.mxu0 0
    %275 = vmatpush1.bf16.msra.mxu0 %v258
    %276 = vmatprep.subr.bf16.mxu0 0
    %277 = vmatpush1.bf16.msra.mxu0 %v259
    %278 = vmatprep.subr.bf16.mxu0 0
    %279 = vmatpush1.bf16.msra.mxu0 %v260
    %280 = vmatprep.subr.bf16.mxu0 0
    %281 = vmatpush1.bf16.msra.mxu0 %v261
    %282 = vmatprep.subr.bf16.mxu0 0
    %283 = vmatpush1.bf16.msra.mxu0 %v262
    %284 = vmatprep.subr.bf16.mxu0 0
    %285 = vmatpush1.bf16.msra.mxu0 %v263
    %286 = vmatprep.subr.bf16.mxu0 0
    %287 = vmatpush1.bf16.msra.mxu0 %v264
    %288 = vmatprep.subr.bf16.mxu0 0
    %289 = vmatpush1.bf16.msra.mxu0 %v265
    %290 = vmatprep.subr.bf16.mxu0 0
    %291 = vmatpush1.bf16.msra.mxu0 0
    %292 = vmatprep.subr.bf16.mxu0 0
    %293 = vmatpush1.bf16.msra.mxu0 0
    %294 = vmatprep.subr.bf16.mxu0 0
    %295 = vmatpush1.bf16.msra.mxu0 0
    %296 = vmatprep.subr.bf16.mxu0 0
    %297 = vmatpush1.bf16.msra.mxu0 0
    %298 = vmatprep.subr.bf16.mxu0 0
    %299 = vmatpush1.bf16.msra.mxu0 0
    %300 = vmatprep.subr.bf16.mxu0 0
    %301 = vmatpush1.bf16.msra.mxu0 0
    %302 = vmatprep.subr.bf16.mxu0 0
    %303 = vmatpush1.bf16.msra.mxu0 0
    %304 = vmatprep.subr.bf16.mxu0 0
    %305 = vmatpush1.bf16.msra.mxu0 0
    %306 = vmatprep.mubr.bf16.mxu0 0
    %307 = vmatmul.mubr.bf16.gmra.mrb[0].mxu0 %v202
    %v308 = vpop.f32.mrb[0].mxu0
    %v309 = vadd.f32 %v224, %v308
    %v310 = vpop.f32.mrb[0].mxu0
    %v311 = vpop.f32.mrb[0].mxu0
    %v312 = vpop.f32.mrb[0].mxu0
    %313 = vdwg.mxu0
    %v314 = vtanh.pop %v309
    %v315 = vmax.f32 %v314, -1.0
    %v316 = vmin.f32 %v315, 1.0
    %vm317 = vcmask 64512
    %318 = vst.msk [vmem:[#allocation2] sm:$0xff] %vm317, %v316
    // Predicated region
    $region30: #{tpu_custom_call.1} parent=1 // pred_check
      _
    $region31: #{tpu_custom_call.1} parent=1 // pred_check_branch
      %320 = sbr.rel (0) target = $region33
    $region32: #{tpu_custom_call.1} parent=1 // pred_region
      %s322 = ssub.s32 128, 128
      %323 = vsyncadd [#allocation3], %s322
      %s325 = sshll.u32 [#allocation2], 4
      %s326 = int_to_ptr.vmem [resolvable:$true] %s325
      %328 = dma.vmem_to_hbm [thread:$0]  %s326, 128, %s7, [#allocation3]
    $region33: #{tpu_custom_call.1} parent=1 // pred_fallthru
      _
    // Predicated region
    $region34: #{tpu_custom_call.1} parent=1 // pred_check
      _
    $region35: #{tpu_custom_call.1} parent=1 // pred_check_branch
      %330 = sbr.rel (0) target = $region37
    $region36: #{tpu_custom_call.1} parent=1 // pred_region
      %331 = dma.done [#allocation3], 128
    $region37: #{tpu_custom_call.1} parent=1 // pred_fallthru
      _
    %332 = vsyncpa [#allocation3], 1

</llo_original>
